<compile_context>
chip_gen: v7x
topology: tpu7x:2x2x1
jax: 0.10.0
libtpu: 0.0.40
codegen_flags: <defaults>
</compile_context>

<pallas_src>
import jax
import jax.numpy as jnp
from jax.experimental import pallas as pl
from jax.experimental.pallas import tpu as pltpu


def _mountain_pad_kernel(x_ref, o_ref):
    # x_ref : (BN, 4, H, W)      o_ref : (BN, 4, H+2, W+2)
    bn, c, hp2, wp2 = o_ref.shape
    h, w = hp2 - 2, wp2 - 2
    dtype = o_ref.dtype

    x = x_ref[...]

    # Per-channel border value: 1.0 on channel 0, 0.0 on channels 1..3.
    ch = jax.lax.broadcasted_iota(jnp.int32, (bn, c, 1, wp2), 1)
    border_row = jnp.where(ch == 0, 1.0, 0.0).astype(dtype)          # (BN, C, 1, W+2)
    border_col = jnp.broadcast_to(border_row[:, :, :, 0:1], (bn, c, h, 1))

    # Assemble the whole padded tile in registers (VALU/XLU have full slack —
    # there is no matmul work), then issue a single dense block store.
    hpad = jnp.concatenate([border_col, x, border_col], axis=3)       # (BN, C, H, W+2)
    tile = jnp.concatenate([border_row, hpad, border_row], axis=2)    # (BN, C, H+2, W+2)

    o_ref[...] = tile


# Budget the double-buffered input + output blocks well under v5e's 16 MiB
# default scoped VMEM and v7x's 64 MiB physical VMEM.
_VMEM_BLOCK_BUDGET = 12 * 1024 * 1024
_VMEM_LIMIT_BYTES = 32 * 1024 * 1024


def _tiled_plane_bytes(h, w, itemsize):
    """Real VMEM footprint of an (h, w) f32 plane after (8, 128) tiling."""
    ph = -(-h // 8) * 8
    pw = -(-w // 128) * 128
    return ph * pw * itemsize


def mountain_pad(x):
    """Pallas implementation of MountainPadder.forward (NCHW)."""
    N, C, H, W = x.shape
    assert C == 4, "MountainPadder assumes 4 channels"

    itemsize = jnp.dtype(x.dtype).itemsize
    # Per batch element, per pipeline buffer, using the (8,128)-tiled footprint.
    in_bytes = C * _tiled_plane_bytes(H, W, itemsize)
    out_bytes = C * _tiled_plane_bytes(H + 2, W + 2, itemsize)
    bytes_per_n = 2 * (in_bytes + out_bytes)          # x2: double-buffering

    bn_budget = max(1, _VMEM_BLOCK_BUDGET // bytes_per_n)
    # Keep >= 2 grid steps when N > 1 so both v7x TensorCores get work.
    bn_cap = pl.cdiv(N, 2) if N > 1 else 1
    bn = max(1, min(N, bn_budget, bn_cap))

    grid = (pl.cdiv(N, bn),)   # ragged tail: out-of-bounds rows are dropped

    out_shape = jax.ShapeDtypeStruct((N, C, H + 2, W + 2), x.dtype)

    return pl.pallas_call(
        _mountain_pad_kernel,
        out_shape=out_shape,
        grid=grid,
        in_specs=[
            pl.BlockSpec((bn, C, H, W), lambda i: (i, 0, 0, 0)),
        ],
        out_specs=pl.BlockSpec((bn, C, H + 2, W + 2), lambda i: (i, 0, 0, 0)),
        compiler_params=pltpu.CompilerParams(
            dimension_semantics=("parallel",),
            vmem_limit_bytes=_VMEM_LIMIT_BYTES,
        ),
    )(x)


def mountain_pad_ref(x):
    """Pure-JAX reference mirroring the PyTorch module."""
    N, C, H, W = x.shape
    mountain = jnp.array([1.0, 0.0, 0.0, 0.0], dtype=x.dtype).reshape(1, 4, 1, 1)
    side = jnp.broadcast_to(mountain, (N, 4, H, 1))
    hpad = jnp.concatenate([side, x, side], axis=3)
    vert = jnp.broadcast_to(mountain, (N, 4, 1, W + 2))
    return jnp.concatenate([vert, hpad, vert], axis=2)


if __name__ == "__main__":
    key = jax.random.PRNGKey(0)
    x = jax.random.normal(key, (2, 4, 16, 16), dtype=jnp.float32)

    out = jax.block_until_ready(mountain_pad(x))

    ref = mountain_pad_ref(x)
    assert out.shape == (2, 4, 18, 18), out.shape
    assert jnp.allclose(out, ref), "mismatch vs reference"

    print("KERNEL_OK")
</pallas_src>

<mosaic_0001>
module attributes {stable_mosaic.version = 11 : i64} {
  func.func @_mountain_pad_kernel(%arg0: i32, %arg1: memref<1x4x16x16xf32, #tpu.memory_space<vmem>>, %arg2: memref<1x4x18x18xf32, #tpu.memory_space<vmem>>) attributes {dimension_semantics = [#tpu.dimension_semantics<parallel>], iteration_bounds = array<i64: 2>, scalar_prefetch = 0 : i64, scratch_operands = 0 : i64, tpu.core_type = #tpu.core_type<tc>, window_params = [{transform_indices = @transform_0, window_bounds = array<i64: 1, 4, 16, 16>}, {transform_indices = @transform_1, window_bounds = array<i64: 1, 4, 18, 18>}]} {
    %c0 = arith.constant 0 : index
    %c0_0 = arith.constant 0 : index
    %c0_1 = arith.constant 0 : index
    %c0_2 = arith.constant 0 : index
    %0 = vector.load %arg1[%c0, %c0_0, %c0_1, %c0_2] : memref<1x4x16x16xf32, #tpu.memory_space<vmem>>, vector<1x4x16x16xf32>
    %1 = tpu.iota {dimensions = array<i32: 1>} : vector<1x4x1x18xi32>
    %c0_i32 = arith.constant 0 : i32
    %2 = vector.broadcast %c0_i32 : i32 to vector<1x4x1x18xi32>
    %3 = arith.cmpi eq, %1, %2 : vector<1x4x1x18xi32>
    %cst = arith.constant 1.000000e+00 : f32
    %cst_3 = arith.constant 0.000000e+00 : f32
    %4 = vector.broadcast %cst : f32 to vector<1x4x1x18xf32>
    %5 = vector.broadcast %cst_3 : f32 to vector<1x4x1x18xf32>
    %6 = arith.select %3, %4, %5 : vector<1x4x1x18xi1>, vector<1x4x1x18xf32>
    %7 = vector.extract_strided_slice %6 {offsets = [0, 0, 0, 0], sizes = [1, 4, 1, 1], strides = [1, 1, 1, 1]} : vector<1x4x1x18xf32> to vector<1x4x1x1xf32>
    %8 = vector.shape_cast %7 : vector<1x4x1x1xf32> to vector<1x4x1x1xf32>
    %9 = vector.broadcast %8 : vector<1x4x1x1xf32> to vector<1x4x16x1xf32>
    %10 = tpu.concatenate %9, %0, %9 in 3 : vector<1x4x16x1xf32>, vector<1x4x16x16xf32>, vector<1x4x16x1xf32> -> vector<1x4x16x18xf32>
    %11 = tpu.concatenate %6, %10, %6 in 2 : vector<1x4x1x18xf32>, vector<1x4x16x18xf32>, vector<1x4x1x18xf32> -> vector<1x4x18x18xf32>
    %c0_4 = arith.constant 0 : index
    %c0_5 = arith.constant 0 : index
    %c0_6 = arith.constant 0 : index
    %c0_7 = arith.constant 0 : index
    %12 = vector.load %arg2[%c0_4, %c0_5, %c0_6, %c0_7] : memref<1x4x18x18xf32, #tpu.memory_space<vmem>>, vector<1x4x18x18xf32>
    tpu.vector_store %arg2[%c0_4, %c0_5, %c0_6, %c0_7], %11 {strides = array<i32>} : memref<1x4x18x18xf32, #tpu.memory_space<vmem>>, vector<1x4x18x18xf32>,
    return
  }
  func.func @transform_0(%arg0: i32) -> (i32, i32, i32, i32) {
    %c0_i32 = arith.constant 0 : i32
    %c0_i32_0 = arith.constant 0 : i32
    %c0_i32_1 = arith.constant 0 : i32
    %c0_i32_2 = arith.constant 0 : i32
    return %arg0, %c0_i32, %c0_i32_0, %c0_i32_1 : i32, i32, i32, i32
  }
  func.func @transform_1(%arg0: i32) -> (i32, i32, i32, i32) {
    %c0_i32 = arith.constant 0 : i32
    %c0_i32_0 = arith.constant 0 : i32
    %c0_i32_1 = arith.constant 0 : i32
    %c0_i32_2 = arith.constant 0 : i32
    return %arg0, %c0_i32, %c0_i32_0, %c0_i32_1 : i32, i32, i32, i32
  }
}

</mosaic_0001>

<llo_original>
// kernel: tpu_custom_call.1
$region0: #{tpu_custom_call.1}
  #allocation0 [shape = 'u32[]', space=smem, size = 0x4, offset = 0x4, fixed_abs, tag = 'smem constant byte address 0x4 - core index']
  #allocation1 [shape = 'u32[144,128]{1,0:T(1,128)}', space=vmem, size = 0x12000, scoped, tag = 'internal scratch']
  %s0 = inlined_call_operand.hbm [shape: f32[2,4,16,16], index: 0, kind: input, shape index: {}]
  %s1 = inlined_call_operand.vmem [shape: f32[2,4,18,18], index: 1, kind: output, shape index: {}]
  %s2 = sld [smem:[#allocation0]]
  $region41: #{tpu_custom_call.1} parent=0
    _
  %s4 = ssub.s32 1, %s2
  %s5 = scalar_select 0, %s4, %s2
  $region1: #{tpu_custom_call.1} parent=0
    #allocation2 [shape = 'u8[65536]{0}', space=vmem, size = 0x10000, scoped, tag = 'input window, operand 0']
    #allocation3 [shape = 's32[2]{0}', space=sflag, size = 0x8, scoped, tag = 'scoped memory for tpu_custom_call.1']
    %6 = vsyncpa [#allocation3], 0
    %s7 = scalar_lea.sflag [#allocation3], 1
    %8 = vsyncpa %s7, 0
    loop: start=0, step=1, limit=4
    $region2: #{tpu_custom_call.1} parent=1 // loop_pre_header
      _
    $region3: #{tpu_custom_call.1} parent=1 // loop_header
      %s10 = sphi 0, %s14
      %p11 = scmp.ge.s32.totalorder %s10, 4
      %s20 = sphi 0, %s22
      %s23 = sphi 0, %s20
      %s24 = sphi 0, %s23
      %s40 = sphi 0, %s24
      %s46 = sphi 0, %s48
      %s49 = sphi 0, %s46
      %s50 = sphi 0, %s49
      %s66 = sphi 0, %s50
    $region4: #{tpu_custom_call.1} parent=1 // loop_header_branch
      %13 = sbr.rel (%p11) target = $region8
    $region5: #{tpu_custom_call.1} parent=1 // loop_body
      %s15 = ssub.s32 %s10, 1
      %s16 = ssub.s32 %s10, 2
      %s17 = sadd.s32 %s10, 1
      %s18 = ssub.s32 %s10, %s17
      %p19 = scmp.eq.s32.totalorder %s18, 0
      %s21 = sadd.s32 %s20, 1
      %s22 = scalar_select %p19, %s20, %s21
      %p25 = pneg %p19
      %p26 = scmp.eq.s32.totalorder %s10, 1
      %p27 = por %p25, %p26
      %p28 = scmp.ne.s32.totalorder %s20, %s23
      %p29 = scmp.eq.s32.totalorder %s10, 0
      %p30 = por %p28, %p29
      %p31 = scmp.ne.s32.totalorder %s20, %s23
      %p32 = scmp.eq.s32.totalorder %s15, 1
      %p33 = por %p31, %p32
      %p34 = scmp.ne.s32.totalorder %s23, %s24
      %p35 = scmp.eq.s32.totalorder %s15, 0
      %p36 = por %p34, %p35
      %p37 = scmp.ne.s32.totalorder %s23, %s24
      %p38 = scmp.eq.s32.totalorder %s16, 1
      %p39 = por %p37, %p38
      %p41 = scmp.ne.s32.totalorder %s24, %s40
      %p42 = scmp.eq.s32.totalorder %s16, 0
      %p43 = por %p41, %p42
      %s44 = ssub.s32 %s10, %s17
      %p45 = scmp.eq.s32.totalorder %s44, 0
      %s47 = sadd.s32 %s46, 1
      %s48 = scalar_select %p45, %s46, %s47
      %p51 = pneg %p45
      %p52 = scmp.eq.s32.totalorder %s10, 1
      %p53 = por %p51, %p52
      %p54 = scmp.ne.s32.totalorder %s46, %s49
      %p55 = scmp.eq.s32.totalorder %s10, 0
      %p56 = por %p54, %p55
      %p57 = scmp.ne.s32.totalorder %s46, %s49
      %p58 = scmp.eq.s32.totalorder %s15, 1
      %p59 = por %p57, %p58
      %p60 = scmp.ne.s32.totalorder %s49, %s50
      %p61 = scmp.eq.s32.totalorder %s15, 0
      %p62 = por %p60, %p61
      %p63 = scmp.ne.s32.totalorder %s49, %s50
      %p64 = scmp.eq.s32.totalorder %s16, 1
      %p65 = por %p63, %p64
      %p67 = scmp.ne.s32.totalorder %s50, %s66
      %p68 = scmp.eq.s32.totalorder %s16, 0
      %p69 = por %p67, %p68
      %p70 = scmp.le.s32.totalorder 1, %s10
      %p71 = scmp.lt.s32.totalorder %s10, 3
      %p72 = pnand %p70, %p71
      %p73 = pneg %p72
      // Predicated region
      $region9: #{tpu_custom_call.1} parent=5 // pred_check
        _
      $region10: #{tpu_custom_call.1} parent=5 // pred_check_branch
        %75 = sbr.rel (%p72) target = $region12
      $region11: #{tpu_custom_call.1} parent=5 // pred_region
        %s76 = ssub.s32 %s10, 1
      $region12: #{tpu_custom_call.1} parent=5 // pred_fallthru
        _
      %p77 = scmp.lt.s32.totalorder %s10, 2
      // Predicated region
      $region13: #{tpu_custom_call.1} parent=5 // pred_check
        %p78 = pneg %p77
      $region14: #{tpu_custom_call.1} parent=5 // pred_check_branch
        %80 = sbr.rel (%p78) target = $region16
      $region15: #{tpu_custom_call.1} parent=5 // pred_region
        // Predicated region
        $region17: #{tpu_custom_call.1} parent=15 // pred_check
          %p81 = pneg %p30
        $region18: #{tpu_custom_call.1} parent=15 // pred_check_branch
          %83 = sbr.rel (%p81) target = $region20
        $region19: #{tpu_custom_call.1} parent=15 // pred_region
          %s84 = sand.u32 %s20, 1
          %s85 = scalar_lea.sflag [#allocation3], %s84
          %s86 = sand.u32 %s20, 1
          %s87 = smul.addr %s86, 64
          %s88 = scalar_lea.vmem [#allocation2], %s87
          %s90 = ssub.s32 1024, 1024
          %91 = vsyncadd %s85, %s90
          %s92 = smul.addr %s10, 8
          %s93 = smul.addr %s92, 128
          %s94 = scalar_lea.hbm %s0, %s93
          %s95 = sshll.u32 %s88, 4
          %s96 = int_to_ptr.vmem [resolvable:$true] %s95
          %101 = dma.hbm_to_vmem [thread:$0]  %s94, 1024, %s96, %s85, 128, 128, 8
        $region20: #{tpu_custom_call.1} parent=15 // pred_fallthru
          _
      $region16: #{tpu_custom_call.1} parent=5 // pred_fallthru
        _
      %p102 = scmp.le.s32.totalorder 1, %s10
      %p103 = scmp.lt.s32.totalorder %s10, 3
      %p104 = pnand %p102, %p103
      %p105 = pneg %p104
      // Predicated region
      $region21: #{tpu_custom_call.1} parent=5 // pred_check
        _
      $region22: #{tpu_custom_call.1} parent=5 // pred_check_branch
        %107 = sbr.rel (%p104) target = $region24
      $region23: #{tpu_custom_call.1} parent=5 // pred_region
        %s108 = ssub.s32 %s10, 1
        %s109 = sand.u32 %s23, 1
        %s110 = scalar_lea.sflag [#allocation3], %s109
        %s111 = sand.u32 %s23, 1
        %s112 = smul.addr %s111, 64
        %s113 = scalar_lea.vmem [#allocation2], %s112
        // Predicated region
        $region25: #{tpu_custom_call.1} parent=23 // pred_check
          %p114 = pneg %p36
        $region26: #{tpu_custom_call.1} parent=23 // pred_check_branch
          %116 = sbr.rel (%p114) target = $region28
        $region27: #{tpu_custom_call.1} parent=23 // pred_region
          %117 = dma.done %s110, 1024
        $region28: #{tpu_custom_call.1} parent=23 // pred_fallthru
          _
        %s118 = sand.u32 %s23, 1
        %s119 = scalar_lea.sflag [#allocation3], %s118
        %s120 = sand.u32 %s23, 1
        %s121 = smul.addr %s120, 64
        %s122 = scalar_lea.vmem [#allocation2], %s121
        %p123 = pneg %p36
        %p124 = pneg %p33
        %p125 = pneg %p62
        %p126 = pneg %p59
        %p127 = scmp.lt.s32.totalorder %s15, 1
        %s128 = scalar_select %p127, %s15, 1
        %s129 = smul.addr %s128, 12
        %s130 = smul.addr %s129, 8
        %s131 = scalar_lea.vmem %s1, %s130
        %p132 = scmp.lt.s32.totalorder %s15, 1
        %s133 = scalar_select %p132, %s15, 1
        %s134 = smul.addr %s133, 12
        %s135 = smul.addr %s134, 8
        %s136 = scalar_lea.vmem %s1, %s135
        %v137 = vld [vmem:[%s113] sm:$0xff]
        %v138 = vld [vmem:[%s113 + $0x8] sm:$0xff]
        %v139 = vld [vmem:[%s113 + $0x10] sm:$0xff]
        %v140 = vld [vmem:[%s113 + $0x18] sm:$0xff]
        %v141 = vld [vmem:[%s113 + $0x20] sm:$0xff]
        %v142 = vld [vmem:[%s113 + $0x28] sm:$0xff]
        %v143 = vld [vmem:[%s113 + $0x30] sm:$0xff]
        %v144 = vld [vmem:[%s113 + $0x38] sm:$0xff]
        %153 = vrot.lane.b32.xlu0 %v137, 1
        %v154 = vpop.permute.xlu0 %153
        %155 = vrot.lane.b32.xlu0 %v138, 1
        %v156 = vpop.permute.xlu0 %155
        %157 = vrot.lane.b32.xlu0 %v139, 1
        %v158 = vpop.permute.xlu0 %157
        %159 = vrot.lane.b32.xlu0 %v140, 1
        %v160 = vpop.permute.xlu0 %159
        %161 = vrot.lane.b32.xlu0 %v141, 1
        %v162 = vpop.permute.xlu0 %161
        %163 = vrot.lane.b32.xlu0 %v142, 1
        %v164 = vpop.permute.xlu0 %163
        %165 = vrot.lane.b32.xlu0 %v143, 1
        %v166 = vpop.permute.xlu0 %165
        %167 = vrot.lane.b32.xlu0 %v144, 1
        %v168 = vpop.permute.xlu0 %167
        %vm177 = vcmask 7168
        %v178 = vsel %vm177, 1.0, %v154
        %v179 = vsel %vm177, 1.0, %v156
        %v180 = vsel %vm177, 0.0, %v158
        %v181 = vsel %vm177, 0.0, %v160
        %v182 = vsel %vm177, 0.0, %v162
        %v183 = vsel %vm177, 0.0, %v164
        %v184 = vsel %vm177, 0.0, %v166
        %v185 = vsel %vm177, 0.0, %v168
        %vm186 = vcmask 138240
        %v187 = vsel %vm186, %v178, 1.0
        %v188 = vsel %vm186, %v179, 1.0
        %v189 = vsel %vm186, %v180, 0.0
        %v190 = vsel %vm186, %v181, 0.0
        %v191 = vsel %vm186, %v182, 0.0
        %v192 = vsel %vm186, %v183, 0.0
        %v193 = vsel %vm186, %v184, 0.0
        %v194 = vsel %vm186, %v185, 0.0
        %vm203 = vcmask 1040384
        %v204 = vrot.slane %v187, 7
        %v205 = vrot.slane %v188, 7
        %v206 = vsel %vm203, %v204, %v205
        %v207 = vrot.slane %v189, 7
        %v208 = vrot.slane %v190, 7
        %v209 = vsel %vm203, %v207, %v208
        %v210 = vrot.slane %v191, 7
        %v211 = vrot.slane %v192, 7
        %v212 = vsel %vm203, %v210, %v211
        %v213 = vrot.slane %v193, 7
        %v214 = vrot.slane %v194, 7
        %v215 = vsel %vm203, %v213, %v214
        %v228 = vsel %vm203, 1.0, %v204
        %v229 = vsel %vm203, 0.0, %v207
        %v230 = vsel %vm203, 0.0, %v210
        %v231 = vsel %vm203, 0.0, %v213
        %v232 = vsel %vm203, %v205, 1.0
        %v233 = vsel %vm203, %v208, 0.0
        %v234 = vsel %vm203, %v211, 0.0
        %v235 = vsel %vm203, %v214, 0.0
        %vm236 = vcmask 146432
        %237 = vst.msk [vmem:[%s136] sm:$0xff] %vm236, %v228
        %238 = vst.msk [vmem:[%s136 + $0x8] sm:$0xff] %vm236, %v206
        %vm239 = vcmask 140288
        %240 = vst.msk [vmem:[%s136 + $0x10] sm:$0x3] %vm239, %v232
        %241 = vst.msk [vmem:[%s136 + $0x18] sm:$0xff] %vm236, %v229
        %242 = vst.msk [vmem:[%s136 + $0x20] sm:$0xff] %vm236, %v209
        %243 = vst.msk [vmem:[%s136 + $0x28] sm:$0x3] %vm239, %v233
        %244 = vst.msk [vmem:[%s136 + $0x30] sm:$0xff] %vm236, %v230
        %245 = vst.msk [vmem:[%s136 + $0x38] sm:$0xff] %vm236, %v212
        %246 = vst.msk [vmem:[%s136 + $0x40] sm:$0x3] %vm239, %v234
        %247 = vst.msk [vmem:[%s136 + $0x48] sm:$0xff] %vm236, %v231
        %248 = vst.msk [vmem:[%s136 + $0x50] sm:$0xff] %vm236, %v215
        %249 = vst.msk [vmem:[%s136 + $0x58] sm:$0x3] %vm239, %v235
        %p250 = scmp.lt.s32.totalorder %s15, 1
        %s251 = scalar_select %p250, %s15, 1
        %s252 = smul.addr %s251, 12
        %s253 = smul.addr %s252, 8
        %s254 = scalar_lea.vmem %s1, %s253
        // Predicated region
        $region29: #{tpu_custom_call.1} parent=23 // pred_check
          %p255 = pneg %p59
        $region30: #{tpu_custom_call.1} parent=23 // pred_check_branch
          %257 = sbr.rel (%p255) target = $region32
        $region31: #{tpu_custom_call.1} parent=23 // pred_region
          _
        $region32: #{tpu_custom_call.1} parent=23 // pred_fallthru
          _
      $region24: #{tpu_custom_call.1} parent=5 // pred_fallthru
        _
      %p258 = scmp.le.s32.totalorder 2, %s10
      // Predicated region
      $region33: #{tpu_custom_call.1} parent=5 // pred_check
        %p259 = pneg %p258
      $region34: #{tpu_custom_call.1} parent=5 // pred_check_branch
        %261 = sbr.rel (%p259) target = $region36
      $region35: #{tpu_custom_call.1} parent=5 // pred_region
        %s262 = ssub.s32 %s10, 2
        // Predicated region
        $region37: #{tpu_custom_call.1} parent=35 // pred_check
          %p263 = pneg %p65
        $region38: #{tpu_custom_call.1} parent=35 // pred_check_branch
          %265 = sbr.rel (%p263) target = $region40
        $region39: #{tpu_custom_call.1} parent=35 // pred_region
          %p266 = scmp.lt.s32.totalorder %s16, 1
          %s267 = scalar_select %p266, %s16, 1
          %s268 = smul.addr %s267, 12
          %s269 = smul.addr %s268, 8
          %s270 = scalar_lea.vmem %s1, %s269
        $region40: #{tpu_custom_call.1} parent=35 // pred_fallthru
          _
      $region36: #{tpu_custom_call.1} parent=5 // pred_fallthru
        _
    $region6: #{tpu_custom_call.1} parent=1 // loop_footer
      %s14 = sadd.s32 1, %s10
    $region7: #{tpu_custom_call.1} parent=1 // loop_footer_branch
      %9 = sbr.rel target = $region3
    $region8: #{tpu_custom_call.1} parent=1 // loop_exit
      _
    %271 = vsyncpa [#allocation3], 1
    %s272 = scalar_lea.sflag [#allocation3], 1
    %273 = vsyncpa %s272, 1

</llo_original>
